<compile_context>
chip_gen: v7x
topology: tpu7x:2x2x1
jax: 0.10.0
libtpu: 0.0.40
codegen_flags: <defaults>
</compile_context>

<pallas_src>
import jax
import jax.numpy as jnp
from jax.experimental import pallas as pl
from jax.experimental.pallas import tpu as pltpu

_SQRT_2_OVER_PI = 0.7978845608028654          # sqrt(2/pi)
_TWO_SQRT_2_OVER_PI = 2.0 * _SQRT_2_OVER_PI   # 2*sqrt(2/pi)


def _gelu_new(x):
    # GPT-2 "gelu_new" (tanh approximation), matches transformers ACT2FN["gelu_new"].
    # 0.5*x*(1+tanh(u)) == x*sigmoid(2u); sigmoid form saves one add + one mul
    # on the VPU, transcendental goes to the EUP.  x*x*x (not jnp.power) stays
    # on the VALU.
    return x * jax.nn.sigmoid(_TWO_SQRT_2_OVER_PI * (x + 0.044715 * x * x * x))


# ----------------------------------------------------------------------------
# Kernels
# ----------------------------------------------------------------------------
def _mlp_fused_kernel(x_ref, w_fc_ref, b_fc_ref, w_proj_ref, b_proj_ref, o_ref):
    """Fully-fused path: both weights resident in VMEM, one grid axis over rows."""
    x = x_ref[...].astype(jnp.bfloat16)                                   # [TM, D]
    h = jnp.dot(x, w_fc_ref[...], preferred_element_type=jnp.float32)     # [TM, I] f32
    h = _gelu_new(h + b_fc_ref[...])
    y = jnp.dot(h.astype(jnp.bfloat16), w_proj_ref[...],
                preferred_element_type=jnp.float32)                       # [TM, D] f32
    o_ref[...] = (y + b_proj_ref[...]).astype(o_ref.dtype)


def _mlp_itiled_kernel(x_ref, w_fc_ref, b_fc_ref, w_proj_ref, b_proj_ref,
                       o_ref, acc_ref):
    """I-tiled path: grid = (row tiles, intermediate chunks); f32 accumulator."""
    k = pl.program_id(1)

    @pl.when(k == 0)
    def _():
        acc_ref[...] = jnp.zeros_like(acc_ref)

    x = x_ref[...].astype(jnp.bfloat16)                                   # [TM, D]
    h = jnp.dot(x, w_fc_ref[...], preferred_element_type=jnp.float32)     # [TM, TI]
    h = _gelu_new(h + b_fc_ref[...])
    acc_ref[...] += jnp.dot(h.astype(jnp.bfloat16), w_proj_ref[...],
                            preferred_element_type=jnp.float32)           # [TM, D]

    @pl.when(k == pl.num_programs(1) - 1)
    def _():
        o_ref[...] = (acc_ref[...] + b_proj_ref[...]).astype(o_ref.dtype)


# ----------------------------------------------------------------------------
# Helpers
# ----------------------------------------------------------------------------
def _round_up(x, m):
    return ((x + m - 1) // m) * m


def _vmem_limit_bytes():
    """Per-chip VMEM budget: ~7/8 of capacity (64 MiB fallback works everywhere)."""
    cap = 64 * 1024 * 1024
    try:
        info = pltpu.get_tpu_info()
        cap = int(getattr(info, "vmem_capacity_bytes", cap))
    except Exception:
        pass
    return (cap * 7) // 8


def _fused_vmem_bytes(tm, d, i):
    w = 2 * d * i * 2                 # both bf16 weights, single-buffered
    b = (i + d) * 4 * 2               # biases (tiny)
    xt = tm * d * 4 * 2               # x tile, double-buffered
    ot = tm * d * 4 * 2               # out tile, double-buffered
    h = tm * i * 4 + tm * i * 2       # f32 intermediate + bf16 copy
    return w + b + xt + ot + h


def _itiled_vmem_bytes(tm, d, i, ti):
    del i
    w = 2 * d * ti * 2 * 2            # bf16 weight chunks, double-buffered
    b = (ti + d) * 4 * 2
    xt = tm * d * 4 * 2
    ot = tm * d * 4 * 2
    acc = tm * d * 4
    h = tm * ti * 4 + tm * ti * 2
    return w + b + xt + ot + acc + h


def _valid_tis(i):
    if i % 128 != 0:
        return [i]                    # single chunk (toy / non-aligned sizes)
    return [t for t in range(128, i + 1, 128) if i % t == 0]


# ----------------------------------------------------------------------------
# pallas_call wrappers
# ----------------------------------------------------------------------------
def _run_fused(x2d, w_fc, b_fc, w_proj, b_proj, tm, vmem_limit):
    m_pad, d = x2d.shape
    i = w_fc.shape[1]
    grid = (m_pad // tm,)
    ce = pl.CostEstimate(
        flops=4 * m_pad * d * i,
        transcendentals=m_pad * i,
        bytes_accessed=2 * m_pad * d * 4 + 2 * d * i * 2 + (i + d) * 4,
    )

    def build(weight_mode):
        kw = {} if weight_mode is None else {"pipeline_mode": weight_mode}
        return pl.pallas_call(
            _mlp_fused_kernel,
            out_shape=jax.ShapeDtypeStruct((m_pad, d), x2d.dtype),
            grid_spec=pltpu.PrefetchScalarGridSpec(
                num_scalar_prefetch=0,
                grid=grid,
                in_specs=[
                    pl.BlockSpec((tm, d), lambda m: (m, 0)),            # x row tile
                    pl.BlockSpec((d, i), lambda m: (0, 0), **kw),       # W_fc resident
                    pl.BlockSpec((1, i), lambda m: (0, 0), **kw),       # b_fc resident
                    pl.BlockSpec((i, d), lambda m: (0, 0), **kw),       # W_proj resident
                    pl.BlockSpec((1, d), lambda m: (0, 0), **kw),       # b_proj resident
                ],
                out_specs=pl.BlockSpec((tm, d), lambda m: (m, 0)),
            ),
            compiler_params=pltpu.CompilerParams(
                dimension_semantics=("parallel",),
                vmem_limit_bytes=vmem_limit,
            ),
            cost_estimate=ce,
        )

    try:
        # Single-buffer the constant-index resident operands (halves their VMEM).
        return build(pl.Buffered(1))(x2d, w_fc, b_fc, w_proj, b_proj)
    except Exception:
        # Fallback for jax builds where BlockSpec pipeline_mode is unsupported.
        return build(None)(x2d, w_fc, b_fc, w_proj, b_proj)


def _run_itiled(x2d, w_fc, b_fc, w_proj, b_proj, tm, ti, vmem_limit):
    m_pad, d = x2d.shape
    i = w_fc.shape[1]
    grid_m = m_pad // tm
    grid_k = i // ti
    ce = pl.CostEstimate(
        flops=4 * m_pad * d * i,
        transcendentals=m_pad * i,
        bytes_accessed=2 * m_pad * d * 4 + grid_m * 2 * d * i * 2 + (i + d) * 4,
    )

    return pl.pallas_call(
        _mlp_itiled_kernel,
        out_shape=jax.ShapeDtypeStruct((m_pad, d), x2d.dtype),
        grid_spec=pltpu.PrefetchScalarGridSpec(
            num_scalar_prefetch=0,
            grid=(grid_m, grid_k),
            in_specs=[
                pl.BlockSpec((tm, d), lambda m, k: (m, 0)),     # x row tile (resident over k)
                pl.BlockSpec((d, ti), lambda m, k: (0, k)),     # W_fc column chunk
                pl.BlockSpec((1, ti), lambda m, k: (0, k)),     # b_fc chunk
                pl.BlockSpec((ti, d), lambda m, k: (k, 0)),     # W_proj row chunk
                pl.BlockSpec((1, d), lambda m, k: (0, 0)),      # b_proj
            ],
            out_specs=pl.BlockSpec((tm, d), lambda m, k: (m, 0)),
            scratch_shapes=[pltpu.VMEM((tm, d), jnp.float32)],  # f32 accumulator
        ),
        compiler_params=pltpu.CompilerParams(
            dimension_semantics=("parallel", "arbitrary"),
            vmem_limit_bytes=vmem_limit,
        ),
        cost_estimate=ce,
    )(x2d, w_fc, b_fc, w_proj, b_proj)


def gpt2_mlp(hidden_states, w_fc, b_fc, w_proj, b_proj, *,
             tm=512, max_ti=2048, force_itiled=False):
    """GPT2MLP forward (eval mode).

    hidden_states: [B, S, D] float32
    w_fc: [D, I], b_fc: [I]     (Conv1D stores weight as [in, out])
    w_proj: [I, D], b_proj: [D]
    Returns [B, S, D] float32.
    """
    B, S, D = hidden_states.shape
    I = w_fc.shape[1]
    M = B * S

    # Cast weights to bf16 only if the caller didn't pre-cast (hoist-able).
    w_fc_bf = w_fc if w_fc.dtype == jnp.bfloat16 else w_fc.astype(jnp.bfloat16)
    w_proj_bf = w_proj if w_proj.dtype == jnp.bfloat16 else w_proj.astype(jnp.bfloat16)
    b_fc2d = b_fc.reshape(1, I).astype(jnp.float32)
    b_proj2d = b_proj.reshape(1, D).astype(jnp.float32)

    vmem_limit = _vmem_limit_bytes()
    budget = int(0.75 * vmem_limit)

    # Row tiling: pad M minimally to a multiple of 8; prefer shrinking tm over
    # a jnp.pad copy when a smaller tile divides M exactly.
    m_pad = _round_up(M, 8)
    tm = _round_up(min(tm, m_pad), 8)
    if m_pad % tm != 0:
        for cand in (tm // 2, tm // 4):
            if cand >= 128 and cand % 8 == 0 and m_pad % cand == 0:
                tm = cand
                break
        else:
            m_pad = _round_up(m_pad, tm)

    x2d = hidden_states.reshape(M, D)
    if m_pad != M:
        x2d = jnp.pad(x2d, ((0, m_pad - M), (0, 0)))

    use_fused = (not force_itiled) and _fused_vmem_bytes(tm, D, I) <= budget

    if use_fused:
        out2d = _run_fused(x2d, w_fc_bf, b_fc2d, w_proj_bf, b_proj2d, tm, vmem_limit)
    else:
        tis = [t for t in _valid_tis(I) if t <= max_ti] or [min(_valid_tis(I))]
        ti = tis[0]
        for t in tis:  # largest valid chunk that fits the budget
            if _itiled_vmem_bytes(tm, D, I, t) <= budget:
                ti = t
        out2d = _run_itiled(x2d, w_fc_bf, b_fc2d, w_proj_bf, b_proj2d, tm, ti, vmem_limit)

    return out2d[:M].reshape(B, S, D)


# ----------------------------------------------------------------------------
# Reference (mirrors kernel numerics: bf16 matmul operands, f32 accumulation)
# ----------------------------------------------------------------------------
def _reference(hidden_states, w_fc, b_fc, w_proj, b_proj):
    B, S, D = hidden_states.shape
    x = hidden_states.reshape(-1, D).astype(jnp.bfloat16)
    h = jnp.dot(x, w_fc.astype(jnp.bfloat16),
                preferred_element_type=jnp.float32) + b_fc
    h = _gelu_new(h)
    y = jnp.dot(h.astype(jnp.bfloat16), w_proj.astype(jnp.bfloat16),
                preferred_element_type=jnp.float32) + b_proj
    return y.reshape(B, S, D).astype(hidden_states.dtype)


if __name__ == "__main__":
    key = jax.random.PRNGKey(0)
    k_x, k_wfc, k_bfc, k_wproj, k_bproj, k_wfc2, k_bfc2, k_wproj2 = jax.random.split(key, 8)

    # small shapes consistent with the module: batch=2, seq=8,
    # hidden_size=32, intermediate_size=4*hidden=128
    B, S, D = 2, 8, 32
    x = jax.random.normal(k_x, (B, S, D), dtype=jnp.float32)

    # --- Test 1: fused resident-weight path --------------------------------
    I1 = 4 * D
    w_fc1 = 0.02 * jax.random.normal(k_wfc, (D, I1), dtype=jnp.float32)
    b_fc1 = 0.1 * jax.random.normal(k_bfc, (I1,), dtype=jnp.float32)
    w_proj1 = 0.02 * jax.random.normal(k_wproj, (I1, D), dtype=jnp.float32)
    b_proj1 = 0.1 * jax.random.normal(k_bproj, (D,), dtype=jnp.float32)

    # Pre-cast weights once (stands in for a parameter-load-time cast).
    out1 = gpt2_mlp(x, w_fc1.astype(jnp.bfloat16), b_fc1,
                    w_proj1.astype(jnp.bfloat16), b_proj1)
    out1 = jax.block_until_ready(out1)
    ref1 = _reference(x, w_fc1, b_fc1, w_proj1, b_proj1)
    assert out1.shape == (B, S, D)
    assert jnp.allclose(out1, ref1, atol=2e-3, rtol=2e-3), (
        float(jnp.max(jnp.abs(out1 - ref1))))

    # --- Test 2: force the I-tiled accumulator path (2 chunks over I) -------
    I2 = 8 * D  # 256 -> two 128-wide intermediate chunks
    w_fc2 = 0.02 * jax.random.normal(k_wfc2, (D, I2), dtype=jnp.float32)
    b_fc2 = 0.1 * jax.random.normal(k_bfc2, (I2,), dtype=jnp.float32)
    w_proj2 = 0.02 * jax.random.normal(k_wproj2, (I2, D), dtype=jnp.float32)
    b_proj2 = b_proj1

    out2 = gpt2_mlp(x, w_fc2, b_fc2, w_proj2, b_proj2,
                    force_itiled=True, max_ti=128)
    out2 = jax.block_until_ready(out2)
    ref2 = _reference(x, w_fc2, b_fc2, w_proj2, b_proj2)
    assert out2.shape == (B, S, D)
    assert jnp.allclose(out2, ref2, atol=2e-3, rtol=2e-3), (
        float(jnp.max(jnp.abs(out2 - ref2))))

    # TODO(synk): AdapterController / LoRA branches, P_count_vec and Dropout are
    # identity in the eval configuration and therefore not translated.
    print("KERNEL_OK")
</pallas_src>

<mosaic_0001>
module attributes {stable_mosaic.version = 11 : i64} {
  func.func @_mlp_fused_kernel(%arg0: i32, %arg1: memref<16x32xf32, #tpu.memory_space<vmem>>, %arg2: memref<32x128xbf16, #tpu.memory_space<vmem>>, %arg3: memref<1x128xf32, #tpu.memory_space<vmem>>, %arg4: memref<128x32xbf16, #tpu.memory_space<vmem>>, %arg5: memref<1x32xf32, #tpu.memory_space<vmem>>, %arg6: memref<16x32xf32, #tpu.memory_space<vmem>>) attributes {dimension_semantics = [#tpu.dimension_semantics<parallel>], iteration_bounds = array<i64: 1>, scalar_prefetch = 0 : i64, scratch_operands = 0 : i64, tpu.core_type = #tpu.core_type<tc>, window_params = [{transform_indices = @transform_0, window_bounds = array<i64: 16, 32>}, {pipeline_mode = #tpu.pipeline_mode<synchronous>, transform_indices = @transform_1, window_bounds = array<i64: 32, 128>}, {pipeline_mode = #tpu.pipeline_mode<synchronous>, transform_indices = @transform_2, window_bounds = array<i64: 1, 128>}, {pipeline_mode = #tpu.pipeline_mode<synchronous>, transform_indices = @transform_3, window_bounds = array<i64: 128, 32>}, {pipeline_mode = #tpu.pipeline_mode<synchronous>, transform_indices = @transform_4, window_bounds = array<i64: 1, 32>}, {transform_indices = @transform_5, window_bounds = array<i64: 16, 32>}]} {
    %c0 = arith.constant 0 : index
    %c0_0 = arith.constant 0 : index
    %0 = vector.load %arg1[%c0, %c0_0] : memref<16x32xf32, #tpu.memory_space<vmem>>, vector<16x32xf32>
    %1 = arith.truncf %0 : vector<16x32xf32> to vector<16x32xbf16>
    %c0_1 = arith.constant 0 : index
    %c0_2 = arith.constant 0 : index
    %2 = vector.load %arg2[%c0_1, %c0_2] : memref<32x128xbf16, #tpu.memory_space<vmem>>, vector<32x128xbf16>
    %cst = arith.constant dense<0.000000e+00> : vector<16x128xf32>
    %3 = tpu.matmul %1, %2, %cst {dimension_numbers = #tpu.dot_dimension_numbers<[1], [0], [0], [1], [0, 0, 1, 1], [], []>} : vector<16x32xbf16>, vector<32x128xbf16>, vector<16x128xf32> -> vector<16x128xf32>
    %c0_3 = arith.constant 0 : index
    %c0_4 = arith.constant 0 : index
    %4 = vector.load %arg3[%c0_3, %c0_4] : memref<1x128xf32, #tpu.memory_space<vmem>>, vector<1x128xf32>
    %5 = vector.broadcast %4 : vector<1x128xf32> to vector<16x128xf32>
    %6 = arith.addf %3, %5 : vector<16x128xf32>
    %cst_5 = arith.constant 4.471500e-02 : f32
    %7 = vector.broadcast %cst_5 : f32 to vector<16x128xf32>
    %8 = arith.mulf %7, %6 : vector<16x128xf32>
    %9 = arith.mulf %8, %6 : vector<16x128xf32>
    %10 = arith.mulf %9, %6 : vector<16x128xf32>
    %11 = arith.addf %6, %10 : vector<16x128xf32>
    %cst_6 = arith.constant 1.59576917 : f32
    %12 = vector.broadcast %cst_6 : f32 to vector<16x128xf32>
    %13 = arith.mulf %12, %11 : vector<16x128xf32>
    %14 = arith.negf %13 : vector<16x128xf32>
    %15 = math.exp %14 : vector<16x128xf32>
    %cst_7 = arith.constant 1.000000e+00 : f32
    %16 = vector.broadcast %cst_7 : f32 to vector<16x128xf32>
    %17 = arith.addf %16, %15 : vector<16x128xf32>
    %18 = arith.divf %16, %17 : vector<16x128xf32>
    %19 = arith.mulf %6, %18 : vector<16x128xf32>
    %20 = arith.truncf %19 : vector<16x128xf32> to vector<16x128xbf16>
    %c0_8 = arith.constant 0 : index
    %c0_9 = arith.constant 0 : index
    %21 = vector.load %arg4[%c0_8, %c0_9] : memref<128x32xbf16, #tpu.memory_space<vmem>>, vector<128x32xbf16>
    %cst_10 = arith.constant dense<0.000000e+00> : vector<16x32xf32>
    %22 = tpu.matmul %20, %21, %cst_10 {dimension_numbers = #tpu.dot_dimension_numbers<[1], [0], [0], [1], [0, 0, 1, 1], [], []>} : vector<16x128xbf16>, vector<128x32xbf16>, vector<16x32xf32> -> vector<16x32xf32>
    %c0_11 = arith.constant 0 : index
    %c0_12 = arith.constant 0 : index
    %23 = vector.load %arg5[%c0_11, %c0_12] : memref<1x32xf32, #tpu.memory_space<vmem>>, vector<1x32xf32>
    %24 = vector.broadcast %23 : vector<1x32xf32> to vector<16x32xf32>
    %25 = arith.addf %22, %24 : vector<16x32xf32>
    %c0_13 = arith.constant 0 : index
    %c0_14 = arith.constant 0 : index
    %26 = vector.load %arg6[%c0_13, %c0_14] : memref<16x32xf32, #tpu.memory_space<vmem>>, vector<16x32xf32>
    tpu.vector_store %arg6[%c0_13, %c0_14], %25 {strides = array<i32>} : memref<16x32xf32, #tpu.memory_space<vmem>>, vector<16x32xf32>,
    return
  }
  func.func @transform_0(%arg0: i32) -> (i32, i32) {
    %c0_i32 = arith.constant 0 : i32
    %c0_i32_0 = arith.constant 0 : i32
    return %arg0, %c0_i32 : i32, i32
  }
  func.func @transform_1(%arg0: i32) -> (i32, i32) {
    %c0_i32 = arith.constant 0 : i32
    %c0_i32_0 = arith.constant 0 : i32
    %c0_i32_1 = arith.constant 0 : i32
    return %c0_i32, %c0_i32_0 : i32, i32
  }
  func.func @transform_2(%arg0: i32) -> (i32, i32) {
    %c0_i32 = arith.constant 0 : i32
    %c0_i32_0 = arith.constant 0 : i32
    %c0_i32_1 = arith.constant 0 : i32
    return %c0_i32, %c0_i32_0 : i32, i32
  }
  func.func @transform_3(%arg0: i32) -> (i32, i32) {
    %c0_i32 = arith.constant 0 : i32
    %c0_i32_0 = arith.constant 0 : i32
    %c0_i32_1 = arith.constant 0 : i32
    return %c0_i32, %c0_i32_0 : i32, i32
  }
  func.func @transform_4(%arg0: i32) -> (i32, i32) {
    %c0_i32 = arith.constant 0 : i32
    %c0_i32_0 = arith.constant 0 : i32
    %c0_i32_1 = arith.constant 0 : i32
    return %c0_i32, %c0_i32_0 : i32, i32
  }
  func.func @transform_5(%arg0: i32) -> (i32, i32) {
    %c0_i32 = arith.constant 0 : i32
    %c0_i32_0 = arith.constant 0 : i32
    return %arg0, %c0_i32 : i32, i32
  }
}

module attributes {stable_mosaic.version = 11 : i64} {
  func.func @_mlp_fused_kernel(%arg0: i32, %arg1: memref<16x32xf32, #tpu.memory_space<vmem>>, %arg2: memref<32x128xbf16, #tpu.memory_space<vmem>>, %arg3: memref<1x128xf32, #tpu.memory_space<vmem>>, %arg4: memref<128x32xbf16, #tpu.memory_space<vmem>>, %arg5: memref<1x32xf32, #tpu.memory_space<vmem>>, %arg6: memref<16x32xf32, #tpu.memory_space<vmem>>) attributes {dimension_semantics = [#tpu.dimension_semantics<parallel>], iteration_bounds = array<i64: 1>, scalar_prefetch = 0 : i64, scratch_operands = 0 : i64, tpu.core_type = #tpu.core_type<tc>, window_params = [{transform_indices = @transform_0, window_bounds = array<i64: 16, 32>}, {pipeline_mode = #tpu.pipeline_mode<synchronous>, transform_indices = @transform_1, window_bounds = array<i64: 32, 128>}, {pipeline_mode = #tpu.pipeline_mode<synchronous>, transform_indices = @transform_2, window_bounds = array<i64: 1, 128>}, {pipeline_mode = #tpu.pipeline_mode<synchronous>, transform_indices = @transform_3, window_bounds = array<i64: 128, 32>}, {pipeline_mode = #tpu.pipeline_mode<synchronous>, transform_indices = @transform_4, window_bounds = array<i64: 1, 32>}, {transform_indices = @transform_5, window_bounds = array<i64: 16, 32>}]} {
    %c0 = arith.constant 0 : index
    %c0_0 = arith.constant 0 : index
    %0 = vector.load %arg1[%c0, %c0_0] : memref<16x32xf32, #tpu.memory_space<vmem>>, vector<16x32xf32>
    %1 = arith.truncf %0 : vector<16x32xf32> to vector<16x32xbf16>
    %c0_1 = arith.constant 0 : index
    %c0_2 = arith.constant 0 : index
    %2 = vector.load %arg2[%c0_1, %c0_2] : memref<32x128xbf16, #tpu.memory_space<vmem>>, vector<32x128xbf16>
    %cst = arith.constant dense<0.000000e+00> : vector<16x128xf32>
    %3 = tpu.matmul %1, %2, %cst {dimension_numbers = #tpu.dot_dimension_numbers<[1], [0], [0], [1], [0, 0, 1, 1], [], []>} : vector<16x32xbf16>, vector<32x128xbf16>, vector<16x128xf32> -> vector<16x128xf32>
    %c0_3 = arith.constant 0 : index
    %c0_4 = arith.constant 0 : index
    %4 = vector.load %arg3[%c0_3, %c0_4] : memref<1x128xf32, #tpu.memory_space<vmem>>, vector<1x128xf32>
    %5 = vector.broadcast %4 : vector<1x128xf32> to vector<16x128xf32>
    %6 = arith.addf %3, %5 : vector<16x128xf32>
    %cst_5 = arith.constant 4.471500e-02 : f32
    %7 = vector.broadcast %cst_5 : f32 to vector<16x128xf32>
    %8 = arith.mulf %7, %6 : vector<16x128xf32>
    %9 = arith.mulf %8, %6 : vector<16x128xf32>
    %10 = arith.mulf %9, %6 : vector<16x128xf32>
    %11 = arith.addf %6, %10 : vector<16x128xf32>
    %cst_6 = arith.constant 1.59576917 : f32
    %12 = vector.broadcast %cst_6 : f32 to vector<16x128xf32>
    %13 = arith.mulf %12, %11 : vector<16x128xf32>
    %14 = arith.negf %13 : vector<16x128xf32>
    %15 = math.exp %14 : vector<16x128xf32>
    %cst_7 = arith.constant 1.000000e+00 : f32
    %16 = vector.broadcast %cst_7 : f32 to vector<16x128xf32>
    %17 = arith.addf %16, %15 : vector<16x128xf32>
    %18 = arith.divf %16, %17 : vector<16x128xf32>
    %19 = arith.mulf %6, %18 : vector<16x128xf32>
    %20 = arith.truncf %19 : vector<16x128xf32> to vector<16x128xbf16>
    %c0_8 = arith.constant 0 : index
    %c0_9 = arith.constant 0 : index
    %21 = vector.load %arg4[%c0_8, %c0_9] : memref<128x32xbf16, #tpu.memory_space<vmem>>, vector<128x32xbf16>
    %cst_10 = arith.constant dense<0.000000e+00> : vector<16x32xf32>
    %22 = tpu.matmul %20, %21, %cst_10 {dimension_numbers = #tpu.dot_dimension_numbers<[1], [0], [0], [1], [0, 0, 1, 1], [], []>} : vector<16x128xbf16>, vector<128x32xbf16>, vector<16x32xf32> -> vector<16x32xf32>
    %c0_11 = arith.constant 0 : index
    %c0_12 = arith.constant 0 : index
    %23 = vector.load %arg5[%c0_11, %c0_12] : memref<1x32xf32, #tpu.memory_space<vmem>>, vector<1x32xf32>
    %24 = vector.broadcast %23 : vector<1x32xf32> to vector<16x32xf32>
    %25 = arith.addf %22, %24 : vector<16x32xf32>
    %c0_13 = arith.constant 0 : index
    %c0_14 = arith.constant 0 : index
    %26 = vector.load %arg6[%c0_13, %c0_14] : memref<16x32xf32, #tpu.memory_space<vmem>>, vector<16x32xf32>
    tpu.vector_store %arg6[%c0_13, %c0_14], %25 {strides = array<i32>} : memref<16x32xf32, #tpu.memory_space<vmem>>, vector<16x32xf32>,
    return
  }
  func.func @transform_0(%arg0: i32) -> (i32, i32) {
    %c0_i32 = arith.constant 0 : i32
    %c0_i32_0 = arith.constant 0 : i32
    return %arg0, %c0_i32 : i32, i32
  }
  func.func @transform_1(%arg0: i32) -> (i32, i32) {
    %c0_i32 = arith.constant 0 : i32
    %c0_i32_0 = arith.constant 0 : i32
    %c0_i32_1 = arith.constant 0 : i32
    return %c0_i32, %c0_i32_0 : i32, i32
  }
  func.func @transform_2(%arg0: i32) -> (i32, i32) {
    %c0_i32 = arith.constant 0 : i32
    %c0_i32_0 = arith.constant 0 : i32
    %c0_i32_1 = arith.constant 0 : i32
    return %c0_i32, %c0_i32_0 : i32, i32
  }
  func.func @transform_3(%arg0: i32) -> (i32, i32) {
    %c0_i32 = arith.constant 0 : i32
    %c0_i32_0 = arith.constant 0 : i32
    %c0_i32_1 = arith.constant 0 : i32
    return %c0_i32, %c0_i32_0 : i32, i32
  }
  func.func @transform_4(%arg0: i32) -> (i32, i32) {
    %c0_i32 = arith.constant 0 : i32
    %c0_i32_0 = arith.constant 0 : i32
    %c0_i32_1 = arith.constant 0 : i32
    return %c0_i32, %c0_i32_0 : i32, i32
  }
  func.func @transform_5(%arg0: i32) -> (i32, i32) {
    %c0_i32 = arith.constant 0 : i32
    %c0_i32_0 = arith.constant 0 : i32
    return %arg0, %c0_i32 : i32, i32
  }
}

</mosaic_0001>

<llo_original>
// kernel: tpu_custom_call.1
$region0: #{tpu_custom_call.1}
  #allocation0 [shape = 'u32[]', space=smem, size = 0x4, offset = 0x4, fixed_abs, tag = 'smem constant byte address 0x4 - core index']
  #allocation1 [shape = 'u32[144,128]{1,0:T(1,128)}', space=vmem, size = 0x12000, scoped, tag = 'internal scratch']
  %s0 = inlined_call_operand.vmem [shape: f32[16,32], index: 0, kind: input, shape index: {}]
  %s1 = inlined_call_operand.vmem [shape: bf16[32,128], index: 1, kind: input, shape index: {}]
  %s2 = inlined_call_operand.vmem [shape: f32[1,128], index: 2, kind: input, shape index: {}]
  %s3 = inlined_call_operand.vmem [shape: bf16[128,32], index: 3, kind: input, shape index: {}]
  %s4 = inlined_call_operand.vmem [shape: f32[1,32], index: 4, kind: input, shape index: {}]
  %s5 = inlined_call_operand.hbm [shape: f32[16,32], index: 5, kind: output, shape index: {}]
  %s6 = sld [smem:[#allocation0]]
  $region30: #{tpu_custom_call.1} parent=0
    _
  %s8 = ssub.s32 1, %s6
  %s9 = scalar_select 0, %s8, %s6
  $region1: #{tpu_custom_call.1} parent=0
    #allocation2 [shape = 'u8[8192]{0}', space=vmem, size = 0x2000, scoped, tag = 'output window, operand 0, single buffered']
    #allocation3 [shape = 's32[1]{0}', space=sflag, size = 0x4, scoped, tag = 'scoped memory for tpu_custom_call.1']
    %10 = vsyncpa [#allocation3], 0
    // Predicated region
    $region2: #{tpu_custom_call.1} parent=1 // pred_check
      _
    $region3: #{tpu_custom_call.1} parent=1 // pred_check_branch
      %12 = sbr.rel (0) target = $region5
    $region4: #{tpu_custom_call.1} parent=1 // pred_region
      _
    $region5: #{tpu_custom_call.1} parent=1 // pred_fallthru
      _
    // Predicated region
    $region6: #{tpu_custom_call.1} parent=1 // pred_check
      _
    $region7: #{tpu_custom_call.1} parent=1 // pred_check_branch
      %14 = sbr.rel (0) target = $region9
    $region8: #{tpu_custom_call.1} parent=1 // pred_region
      _
    $region9: #{tpu_custom_call.1} parent=1 // pred_fallthru
      _
    // Predicated region
    $region10: #{tpu_custom_call.1} parent=1 // pred_check
      _
    $region11: #{tpu_custom_call.1} parent=1 // pred_check_branch
      %16 = sbr.rel (0) target = $region13
    $region12: #{tpu_custom_call.1} parent=1 // pred_region
      _
    $region13: #{tpu_custom_call.1} parent=1 // pred_fallthru
      _
    // Predicated region
    $region14: #{tpu_custom_call.1} parent=1 // pred_check
      _
    $region15: #{tpu_custom_call.1} parent=1 // pred_check_branch
      %18 = sbr.rel (0) target = $region17
    $region16: #{tpu_custom_call.1} parent=1 // pred_region
      _
    $region17: #{tpu_custom_call.1} parent=1 // pred_fallthru
      _
    // Predicated region
    $region18: #{tpu_custom_call.1} parent=1 // pred_check
      _
    $region19: #{tpu_custom_call.1} parent=1 // pred_check_branch
      %20 = sbr.rel (0) target = $region21
    $region20: #{tpu_custom_call.1} parent=1 // pred_region
      _
    $region21: #{tpu_custom_call.1} parent=1 // pred_fallthru
      _
    %v22 = vld [vmem:[%s0] sm:$0xff]
    %v23 = vld [vmem:[%s0 + $0x8] sm:$0xff]
    %v24 = vpack.c.bf16 %v23, %v22
    %v25 = vld [vmem:[%s1] sm:$0xf]
    %v26 = vld [vmem:[%s1 + $0x4] sm:$0xf]
    %v27 = vld [vmem:[%s1 + $0x8] sm:$0xf]
    %v28 = vld [vmem:[%s1 + $0xc] sm:$0xf]
    %v29 = vld [vmem:[%s2] sm:$0x1]
    %v31 = vlaneseq
    %v32 = vshrl.u32 %v31, 7
    %v33 = vsub.s32 0, %v32
    %v34 = vrot.slane %v29, %v33
    %v40 = vunpack.c.l.b16 %v25
    %v41 = vunpack.c.l.b16 %v26
    %v42 = vunpack.c.l.b16 %v27
    %v43 = vunpack.c.l.b16 %v28
    %v44 = vpack.c.b16 %v41, %v40
    %v45 = vpack.c.b16 %v43, %v42
    %vm48 = vcmask 261120
    %v50 = vsel %vm48, %v24, 0
    %52 = vmatprep.subr.bf16.mxu0 0
    %53 = vmatpush1.bf16.msra.mxu0 %v44
    %54 = vmatprep.subr.bf16.mxu0 0
    %55 = vmatpush1.bf16.msra.mxu0 %v45
    %56 = vmatprep.subr.bf16.mxu0 0
    %57 = vmatpush1.bf16.msra.mxu0 0
    %58 = vmatprep.subr.bf16.mxu0 0
    %59 = vmatpush1.bf16.msra.mxu0 0
    %60 = vmatprep.subr.bf16.mxu0 0
    %61 = vmatpush1.bf16.msra.mxu0 0
    %62 = vmatprep.subr.bf16.mxu0 0
    %63 = vmatpush1.bf16.msra.mxu0 0
    %64 = vmatprep.subr.bf16.mxu0 0
    %65 = vmatpush1.bf16.msra.mxu0 0
    %66 = vmatprep.subr.bf16.mxu0 0
    %67 = vmatpush1.bf16.msra.mxu0 0
    %68 = vmatprep.subr.bf16.mxu0 0
    %69 = vmatpush1.bf16.msra.mxu0 0
    %70 = vmatprep.subr.bf16.mxu0 0
    %71 = vmatpush1.bf16.msra.mxu0 0
    %72 = vmatprep.subr.bf16.mxu0 0
    %73 = vmatpush1.bf16.msra.mxu0 0
    %74 = vmatprep.subr.bf16.mxu0 0
    %75 = vmatpush1.bf16.msra.mxu0 0
    %76 = vmatprep.subr.bf16.mxu0 0
    %77 = vmatpush1.bf16.msra.mxu0 0
    %78 = vmatprep.subr.bf16.mxu0 0
    %79 = vmatpush1.bf16.msra.mxu0 0
    %80 = vmatprep.subr.bf16.mxu0 0
    %81 = vmatpush1.bf16.msra.mxu0 0
    %82 = vmatprep.subr.bf16.mxu0 0
    %83 = vmatpush1.bf16.msra.mxu0 0
    %84 = vmatprep.mubr.bf16.mxu0 0
    %85 = vmatmul.mubr.bf16.gmra.mrb[0].mxu0 %v50
    %v86 = vpop.f32.mrb[0].mxu0
    %v87 = vadd.f32 %v34, %v86
    %v88 = vpop.f32.mrb[0].mxu0
    %v89 = vpop.f32.mrb[0].mxu0
    %v90 = vadd.f32 %v34, %v89
    %v91 = vpop.f32.mrb[0].mxu0
    %92 = vdwg.mxu0
    %v93 = vmul.f32 %v87, 0.044715
    %v94 = vmul.f32 %v90, 0.044715
    %v95 = vmul.f32 %v93, %v87
    %v96 = vmul.f32 %v94, %v90
    %v97 = vmul.f32 %v95, %v87
    %v98 = vmul.f32 %v96, %v90
    %v99 = vadd.f32 %v87, %v97
    %v100 = vadd.f32 %v90, %v98
    %v101 = vmul.f32 %v99, 1.5957692
    %v102 = vmul.f32 %v100, 1.5957692
    %v103 = vxor.u32 %v101, 2147483648
    %v104 = vxor.u32 %v102, 2147483648
    %v105 = vmul.f32 %v103, 1.442695
    %v106 = vpow.pop %v105
    %v107 = vmul.f32 %v104, 1.442695
    %v108 = vpow.pop %v107
    %v109 = vadd.f32 %v106, 1.0
    %v110 = vadd.f32 %v108, 1.0
    %v111 = vrcp.pop %v109
    %v112 = vmul.f32 1.0, %v111
    %v113 = vrcp.pop %v110
    %v114 = vmul.f32 1.0, %v113
    %v115 = vmul.f32 %v87, %v112
    %v116 = vmul.f32 %v90, %v114
    %v117 = vpack.c.bf16 %v116, %v115
    %v118 = vld [vmem:[%s3] sm:$0xf]
    %v119 = vld [vmem:[%s3 + $0x4] sm:$0xf]
    %v120 = vld [vmem:[%s3 + $0x8] sm:$0xf]
    %v121 = vld [vmem:[%s3 + $0xc] sm:$0xf]
    %v122 = vld [vmem:[%s3 + $0x10] sm:$0xf]
    %v123 = vld [vmem:[%s3 + $0x14] sm:$0xf]
    %v124 = vld [vmem:[%s3 + $0x18] sm:$0xf]
    %v125 = vld [vmem:[%s3 + $0x1c] sm:$0xf]
    %v126 = vld [vmem:[%s3 + $0x20] sm:$0xf]
    %v127 = vld [vmem:[%s3 + $0x24] sm:$0xf]
    %v128 = vld [vmem:[%s3 + $0x28] sm:$0xf]
    %v129 = vld [vmem:[%s3 + $0x2c] sm:$0xf]
    %v130 = vld [vmem:[%s3 + $0x30] sm:$0xf]
    %v131 = vld [vmem:[%s3 + $0x34] sm:$0xf]
    %v132 = vld [vmem:[%s3 + $0x38] sm:$0xf]
    %v133 = vld [vmem:[%s3 + $0x3c] sm:$0xf]
    %v134 = vld [vmem:[%s4] sm:$0x1]
    %v136 = vlaneseq
    %v137 = vshrl.u32 %v136, 7
    %v138 = vsub.s32 0, %v137
    %v139 = vrot.slane %v134, %v138
    %v157 = vunpack.c.l.b16 %v118
    %v158 = vunpack.c.l.b16 %v119
    %v159 = vunpack.c.l.b16 %v120
    %v160 = vunpack.c.l.b16 %v121
    %v161 = vunpack.c.l.b16 %v122
    %v162 = vunpack.c.l.b16 %v123
    %v163 = vunpack.c.l.b16 %v124
    %v164 = vunpack.c.l.b16 %v125
    %v165 = vunpack.c.l.b16 %v126
    %v166 = vunpack.c.l.b16 %v127
    %v167 = vunpack.c.l.b16 %v128
    %v168 = vunpack.c.l.b16 %v129
    %v169 = vunpack.c.l.b16 %v130
    %v170 = vunpack.c.l.b16 %v131
    %v171 = vunpack.c.l.b16 %v132
    %v172 = vunpack.c.l.b16 %v133
    %v173 = vpack.c.b16 %v158, %v157
    %v174 = vpack.c.b16 %v160, %v159
    %v175 = vpack.c.b16 %v162, %v161
    %v176 = vpack.c.b16 %v164, %v163
    %v177 = vpack.c.b16 %v166, %v165
    %v178 = vpack.c.b16 %v168, %v167
    %v179 = vpack.c.b16 %v170, %v169
    %v180 = vpack.c.b16 %v172, %v171
    %189 = vmatprep.subr.bf16.mxu0 0
    %190 = vmatpush1.bf16.msra.mxu0 %v173
    %191 = vmatprep.subr.bf16.mxu0 0
    %192 = vmatpush1.bf16.msra.mxu0 %v174
    %193 = vmatprep.subr.bf16.mxu0 0
    %194 = vmatpush1.bf16.msra.mxu0 %v175
    %195 = vmatprep.subr.bf16.mxu0 0
    %196 = vmatpush1.bf16.msra.mxu0 %v176
    %197 = vmatprep.subr.bf16.mxu0 0
    %198 = vmatpush1.bf16.msra.mxu0 %v177
    %199 = vmatprep.subr.bf16.mxu0 0
    %200 = vmatpush1.bf16.msra.mxu0 %v178
    %201 = vmatprep.subr.bf16.mxu0 0
    %202 = vmatpush1.bf16.msra.mxu0 %v179
    %203 = vmatprep.subr.bf16.mxu0 0
    %204 = vmatpush1.bf16.msra.mxu0 %v180
    %205 = vmatprep.subr.bf16.mxu0 0
    %206 = vmatpush1.bf16.msra.mxu0 0
    %207 = vmatprep.subr.bf16.mxu0 0
    %208 = vmatpush1.bf16.msra.mxu0 0
    %209 = vmatprep.subr.bf16.mxu0 0
    %210 = vmatpush1.bf16.msra.mxu0 0
    %211 = vmatprep.subr.bf16.mxu0 0
    %212 = vmatpush1.bf16.msra.mxu0 0
    %213 = vmatprep.subr.bf16.mxu0 0
    %214 = vmatpush1.bf16.msra.mxu0 0
    %215 = vmatprep.subr.bf16.mxu0 0
    %216 = vmatpush1.bf16.msra.mxu0 0
    %217 = vmatprep.subr.bf16.mxu0 0
    %218 = vmatpush1.bf16.msra.mxu0 0
    %219 = vmatprep.subr.bf16.mxu0 0
    %220 = vmatpush1.bf16.msra.mxu0 0
    %221 = vmatprep.mubr.bf16.mxu0 0
    %222 = vmatmul.mubr.bf16.gmra.mrb[0].mxu0 %v117
    %v223 = vpop.f32.mrb[0].mxu0
    %v224 = vadd.f32 %v139, %v223
    %v225 = vpop.f32.mrb[0].mxu0
    %v226 = vpop.f32.mrb[0].mxu0
    %v227 = vadd.f32 %v139, %v226
    %v228 = vpop.f32.mrb[0].mxu0
    %229 = vdwg.mxu0
    %230 = vst.msk [vmem:[#allocation2] sm:$0xff] %vm48, %v224
    %231 = vst.msk [vmem:[#allocation2 + $0x8] sm:$0xff] %vm48, %v227
    // Predicated region
    $region22: #{tpu_custom_call.1} parent=1 // pred_check
      _
    $region23: #{tpu_custom_call.1} parent=1 // pred_check_branch
      %233 = sbr.rel (0) target = $region25
    $region24: #{tpu_custom_call.1} parent=1 // pred_region
      %s235 = ssub.s32 256, 256
      %236 = vsyncadd [#allocation3], %s235
      %s237 = sshll.u32 [#allocation2], 4
      %s238 = int_to_ptr.vmem [resolvable:$true] %s237
      %243 = dma.vmem_to_hbm [thread:$0]  %s238, 256, %s5, [#allocation3], 128, 128, 8
    $region25: #{tpu_custom_call.1} parent=1 // pred_fallthru
      _
    // Predicated region
    $region26: #{tpu_custom_call.1} parent=1 // pred_check
      _
    $region27: #{tpu_custom_call.1} parent=1 // pred_check_branch
      %245 = sbr.rel (0) target = $region29
    $region28: #{tpu_custom_call.1} parent=1 // pred_region
      %246 = dma.done [#allocation3], 256
    $region29: #{tpu_custom_call.1} parent=1 // pred_fallthru
      _
    %247 = vsyncpa [#allocation3], 1

// kernel: tpu_custom_call.1
$region0: #{tpu_custom_call.1}
  #allocation0 [shape = 'u32[]', space=smem, size = 0x4, offset = 0x4, fixed_abs, tag = 'smem constant byte address 0x4 - core index']
  #allocation1 [shape = 'u32[144,128]{1,0:T(1,128)}', space=vmem, size = 0x12000, scoped, tag = 'internal scratch']
  %s0 = inlined_call_operand.vmem [shape: f32[16,32], index: 0, kind: input, shape index: {}]
  %s1 = inlined_call_operand.vmem [shape: bf16[32,128], index: 1, kind: input, shape index: {}]
  %s2 = inlined_call_operand.vmem [shape: f32[1,128], index: 2, kind: input, shape index: {}]
  %s3 = inlined_call_operand.vmem [shape: bf16[128,32], index: 3, kind: input, shape index: {}]
  %s4 = inlined_call_operand.vmem [shape: f32[1,32], index: 4, kind: input, shape index: {}]
  %s5 = inlined_call_operand.hbm [shape: f32[16,32], index: 5, kind: output, shape index: {}]
  %s6 = sld [smem:[#allocation0]]
  $region30: #{tpu_custom_call.1} parent=0
    _
  %s8 = ssub.s32 1, %s6
  %s9 = scalar_select 0, %s8, %s6
  $region1: #{tpu_custom_call.1} parent=0
    #allocation2 [shape = 'u8[8192]{0}', space=vmem, size = 0x2000, scoped, tag = 'output window, operand 0, single buffered']
    #allocation3 [shape = 's32[1]{0}', space=sflag, size = 0x4, scoped, tag = 'scoped memory for tpu_custom_call.1']
    %10 = vsyncpa [#allocation3], 0
    // Predicated region
    $region2: #{tpu_custom_call.1} parent=1 // pred_check
      _
    $region3: #{tpu_custom_call.1} parent=1 // pred_check_branch
      %12 = sbr.rel (0) target = $region5
    $region4: #{tpu_custom_call.1} parent=1 // pred_region
      _
    $region5: #{tpu_custom_call.1} parent=1 // pred_fallthru
      _
    // Predicated region
    $region6: #{tpu_custom_call.1} parent=1 // pred_check
      _
    $region7: #{tpu_custom_call.1} parent=1 // pred_check_branch
      %14 = sbr.rel (0) target = $region9
    $region8: #{tpu_custom_call.1} parent=1 // pred_region
      _
    $region9: #{tpu_custom_call.1} parent=1 // pred_fallthru
      _
    // Predicated region
    $region10: #{tpu_custom_call.1} parent=1 // pred_check
      _
    $region11: #{tpu_custom_call.1} parent=1 // pred_check_branch
      %16 = sbr.rel (0) target = $region13
    $region12: #{tpu_custom_call.1} parent=1 // pred_region
      _
    $region13: #{tpu_custom_call.1} parent=1 // pred_fallthru
      _
    // Predicated region
    $region14: #{tpu_custom_call.1} parent=1 // pred_check
      _
    $region15: #{tpu_custom_call.1} parent=1 // pred_check_branch
      %18 = sbr.rel (0) target = $region17
    $region16: #{tpu_custom_call.1} parent=1 // pred_region
      _
    $region17: #{tpu_custom_call.1} parent=1 // pred_fallthru
      _
    // Predicated region
    $region18: #{tpu_custom_call.1} parent=1 // pred_check
      _
    $region19: #{tpu_custom_call.1} parent=1 // pred_check_branch
      %20 = sbr.rel (0) target = $region21
    $region20: #{tpu_custom_call.1} parent=1 // pred_region
      _
    $region21: #{tpu_custom_call.1} parent=1 // pred_fallthru
      _
    %v22 = vld [vmem:[%s0] sm:$0xff]
    %v23 = vld [vmem:[%s0 + $0x8] sm:$0xff]
    %v24 = vpack.c.bf16 %v23, %v22
    %v25 = vld [vmem:[%s1] sm:$0xf]
    %v26 = vld [vmem:[%s1 + $0x4] sm:$0xf]
    %v27 = vld [vmem:[%s1 + $0x8] sm:$0xf]
    %v28 = vld [vmem:[%s1 + $0xc] sm:$0xf]
    %v29 = vld [vmem:[%s2] sm:$0x1]
    %v31 = vlaneseq
    %v32 = vshrl.u32 %v31, 7
    %v33 = vsub.s32 0, %v32
    %v34 = vrot.slane %v29, %v33
    %v40 = vunpack.c.l.b16 %v25
    %v41 = vunpack.c.l.b16 %v26
    %v42 = vunpack.c.l.b16 %v27
    %v43 = vunpack.c.l.b16 %v28
    %v44 = vpack.c.b16 %v41, %v40
    %v45 = vpack.c.b16 %v43, %v42
    %vm48 = vcmask 261120
    %v50 = vsel %vm48, %v24, 0
    %52 = vmatprep.subr.bf16.mxu0 0
    %53 = vmatpush1.bf16.msra.mxu0 %v44
    %54 = vmatprep.subr.bf16.mxu0 0
    %55 = vmatpush1.bf16.msra.mxu0 %v45
    %56 = vmatprep.subr.bf16.mxu0 0
    %57 = vmatpush1.bf16.msra.mxu0 0
    %58 = vmatprep.subr.bf16.mxu0 0
    %59 = vmatpush1.bf16.msra.mxu0 0
    %60 = vmatprep.subr.bf16.mxu0 0
    %61 = vmatpush1.bf16.msra.mxu0 0
    %62 = vmatprep.subr.bf16.mxu0 0
    %63 = vmatpush1.bf16.msra.mxu0 0
    %64 = vmatprep.subr.bf16.mxu0 0
    %65 = vmatpush1.bf16.msra.mxu0 0
    %66 = vmatprep.subr.bf16.mxu0 0
    %67 = vmatpush1.bf16.msra.mxu0 0
    %68 = vmatprep.subr.bf16.mxu0 0
    %69 = vmatpush1.bf16.msra.mxu0 0
    %70 = vmatprep.subr.bf16.mxu0 0
    %71 = vmatpush1.bf16.msra.mxu0 0
    %72 = vmatprep.subr.bf16.mxu0 0
    %73 = vmatpush1.bf16.msra.mxu0 0
    %74 = vmatprep.subr.bf16.mxu0 0
    %75 = vmatpush1.bf16.msra.mxu0 0
    %76 = vmatprep.subr.bf16.mxu0 0
    %77 = vmatpush1.bf16.msra.mxu0 0
    %78 = vmatprep.subr.bf16.mxu0 0
    %79 = vmatpush1.bf16.msra.mxu0 0
    %80 = vmatprep.subr.bf16.mxu0 0
    %81 = vmatpush1.bf16.msra.mxu0 0
    %82 = vmatprep.subr.bf16.mxu0 0
    %83 = vmatpush1.bf16.msra.mxu0 0
    %84 = vmatprep.mubr.bf16.mxu0 0
    %85 = vmatmul.mubr.bf16.gmra.mrb[0].mxu0 %v50
    %v86 = vpop.f32.mrb[0].mxu0
    %v87 = vadd.f32 %v34, %v86
    %v88 = vpop.f32.mrb[0].mxu0
    %v89 = vpop.f32.mrb[0].mxu0
    %v90 = vadd.f32 %v34, %v89
    %v91 = vpop.f32.mrb[0].mxu0
    %92 = vdwg.mxu0
    %v93 = vmul.f32 %v87, 0.044715
    %v94 = vmul.f32 %v90, 0.044715
    %v95 = vmul.f32 %v93, %v87
    %v96 = vmul.f32 %v94, %v90
    %v97 = vmul.f32 %v95, %v87
    %v98 = vmul.f32 %v96, %v90
    %v99 = vadd.f32 %v87, %v97
    %v100 = vadd.f32 %v90, %v98
    %v101 = vmul.f32 %v99, 1.5957692
    %v102 = vmul.f32 %v100, 1.5957692
    %v103 = vxor.u32 %v101, 2147483648
    %v104 = vxor.u32 %v102, 2147483648
    %v105 = vmul.f32 %v103, 1.442695
    %v106 = vpow.pop %v105
    %v107 = vmul.f32 %v104, 1.442695
    %v108 = vpow.pop %v107
    %v109 = vadd.f32 %v106, 1.0
    %v110 = vadd.f32 %v108, 1.0
    %v111 = vrcp.pop %v109
    %v112 = vmul.f32 1.0, %v111
    %v113 = vrcp.pop %v110
    %v114 = vmul.f32 1.0, %v113
    %v115 = vmul.f32 %v87, %v112
    %v116 = vmul.f32 %v90, %v114
    %v117 = vpack.c.bf16 %v116, %v115
    %v118 = vld [vmem:[%s3] sm:$0xf]
    %v119 = vld [vmem:[%s3 + $0x4] sm:$0xf]
    %v120 = vld [vmem:[%s3 + $0x8] sm:$0xf]
    %v121 = vld [vmem:[%s3 + $0xc] sm:$0xf]
    %v122 = vld [vmem:[%s3 + $0x10] sm:$0xf]
    %v123 = vld [vmem:[%s3 + $0x14] sm:$0xf]
    %v124 = vld [vmem:[%s3 + $0x18] sm:$0xf]
    %v125 = vld [vmem:[%s3 + $0x1c] sm:$0xf]
    %v126 = vld [vmem:[%s3 + $0x20] sm:$0xf]
    %v127 = vld [vmem:[%s3 + $0x24] sm:$0xf]
    %v128 = vld [vmem:[%s3 + $0x28] sm:$0xf]
    %v129 = vld [vmem:[%s3 + $0x2c] sm:$0xf]
    %v130 = vld [vmem:[%s3 + $0x30] sm:$0xf]
    %v131 = vld [vmem:[%s3 + $0x34] sm:$0xf]
    %v132 = vld [vmem:[%s3 + $0x38] sm:$0xf]
    %v133 = vld [vmem:[%s3 + $0x3c] sm:$0xf]
    %v134 = vld [vmem:[%s4] sm:$0x1]
    %v136 = vlaneseq
    %v137 = vshrl.u32 %v136, 7
    %v138 = vsub.s32 0, %v137
    %v139 = vrot.slane %v134, %v138
    %v157 = vunpack.c.l.b16 %v118
    %v158 = vunpack.c.l.b16 %v119
    %v159 = vunpack.c.l.b16 %v120
    %v160 = vunpack.c.l.b16 %v121
    %v161 = vunpack.c.l.b16 %v122
    %v162 = vunpack.c.l.b16 %v123
    %v163 = vunpack.c.l.b16 %v124
    %v164 = vunpack.c.l.b16 %v125
    %v165 = vunpack.c.l.b16 %v126
    %v166 = vunpack.c.l.b16 %v127
    %v167 = vunpack.c.l.b16 %v128
    %v168 = vunpack.c.l.b16 %v129
    %v169 = vunpack.c.l.b16 %v130
    %v170 = vunpack.c.l.b16 %v131
    %v171 = vunpack.c.l.b16 %v132
    %v172 = vunpack.c.l.b16 %v133
    %v173 = vpack.c.b16 %v158, %v157
    %v174 = vpack.c.b16 %v160, %v159
    %v175 = vpack.c.b16 %v162, %v161
    %v176 = vpack.c.b16 %v164, %v163
    %v177 = vpack.c.b16 %v166, %v165
    %v178 = vpack.c.b16 %v168, %v167
    %v179 = vpack.c.b16 %v170, %v169
    %v180 = vpack.c.b16 %v172, %v171
    %189 = vmatprep.subr.bf16.mxu0 0
    %190 = vmatpush1.bf16.msra.mxu0 %v173
    %191 = vmatprep.subr.bf16.mxu0 0
    %192 = vmatpush1.bf16.msra.mxu0 %v174
    %193 = vmatprep.subr.bf16.mxu0 0
    %194 = vmatpush1.bf16.msra.mxu0 %v175
    %195 = vmatprep.subr.bf16.mxu0 0
    %196 = vmatpush1.bf16.msra.mxu0 %v176
    %197 = vmatprep.subr.bf16.mxu0 0
    %198 = vmatpush1.bf16.msra.mxu0 %v177
    %199 = vmatprep.subr.bf16.mxu0 0
    %200 = vmatpush1.bf16.msra.mxu0 %v178
    %201 = vmatprep.subr.bf16.mxu0 0
    %202 = vmatpush1.bf16.msra.mxu0 %v179
    %203 = vmatprep.subr.bf16.mxu0 0
    %204 = vmatpush1.bf16.msra.mxu0 %v180
    %205 = vmatprep.subr.bf16.mxu0 0
    %206 = vmatpush1.bf16.msra.mxu0 0
    %207 = vmatprep.subr.bf16.mxu0 0
    %208 = vmatpush1.bf16.msra.mxu0 0
    %209 = vmatprep.subr.bf16.mxu0 0
    %210 = vmatpush1.bf16.msra.mxu0 0
    %211 = vmatprep.subr.bf16.mxu0 0
    %212 = vmatpush1.bf16.msra.mxu0 0
    %213 = vmatprep.subr.bf16.mxu0 0
    %214 = vmatpush1.bf16.msra.mxu0 0
    %215 = vmatprep.subr.bf16.mxu0 0
    %216 = vmatpush1.bf16.msra.mxu0 0
    %217 = vmatprep.subr.bf16.mxu0 0
    %218 = vmatpush1.bf16.msra.mxu0 0
    %219 = vmatprep.subr.bf16.mxu0 0
    %220 = vmatpush1.bf16.msra.mxu0 0
    %221 = vmatprep.mubr.bf16.mxu0 0
    %222 = vmatmul.mubr.bf16.gmra.mrb[0].mxu0 %v117
    %v223 = vpop.f32.mrb[0].mxu0
    %v224 = vadd.f32 %v139, %v223
    %v225 = vpop.f32.mrb[0].mxu0
    %v226 = vpop.f32.mrb[0].mxu0
    %v227 = vadd.f32 %v139, %v226
    %v228 = vpop.f32.mrb[0].mxu0
    %229 = vdwg.mxu0
    %230 = vst.msk [vmem:[#allocation2] sm:$0xff] %vm48, %v224
    %231 = vst.msk [vmem:[#allocation2 + $0x8] sm:$0xff] %vm48, %v227
    // Predicated region
    $region22: #{tpu_custom_call.1} parent=1 // pred_check
      _
    $region23: #{tpu_custom_call.1} parent=1 // pred_check_branch
      %233 = sbr.rel (0) target = $region25
    $region24: #{tpu_custom_call.1} parent=1 // pred_region
      %s235 = ssub.s32 256, 256
      %236 = vsyncadd [#allocation3], %s235
      %s237 = sshll.u32 [#allocation2], 4
      %s238 = int_to_ptr.vmem [resolvable:$true] %s237
      %243 = dma.vmem_to_hbm [thread:$0]  %s238, 256, %s5, [#allocation3], 128, 128, 8
    $region25: #{tpu_custom_call.1} parent=1 // pred_fallthru
      _
    // Predicated region
    $region26: #{tpu_custom_call.1} parent=1 // pred_check
      _
    $region27: #{tpu_custom_call.1} parent=1 // pred_check_branch
      %245 = sbr.rel (0) target = $region29
    $region28: #{tpu_custom_call.1} parent=1 // pred_region
      %246 = dma.done [#allocation3], 256
    $region29: #{tpu_custom_call.1} parent=1 // pred_fallthru
      _
    %247 = vsyncpa [#allocation3], 1

</llo_original>
